<compile_context>
chip_gen: v6e
topology: v6e:2x2x1
jax: 0.10.0
libtpu: 0.0.40
codegen_flags: <defaults>
</compile_context>

<pallas_src>
import functools

import jax
import jax.numpy as jnp
from jax.experimental import pallas as pl
from jax.experimental.pallas import tpu as pltpu

BN_EPS = 1e-5
LANE = 128
H1 = 256   # fc1 out features (from the nn.Module spec)
H2 = 128   # fc2 out features


def improved_nn_kernel(x_ref, w1_ref, bn1_ref, w2_ref, bn2b3_ref, w3_ref, o_ref):
    """Whole forward pass on one VMEM-resident block (small shapes).

    x is f32 (cast to bf16 in-kernel); weights are bf16; matmuls accumulate in
    f32; BN/ReLU elementwise math in f32 (safe on all of v5e/v6e/v7x).
    """
    inv_b = jnp.float32(1.0 / x_ref.shape[0])

    bn1 = bn1_ref[...]        # (2, H1)   f32: [gamma1; beta1]
    bn2b3 = bn2b3_ref[...]    # (3, c_pad) f32: [gamma2|0; beta2|0; b3_padded]
    g1, beta1 = bn1[0:1, :], bn1[1:2, :]
    g2, beta2 = bn2b3[0:1, :H2], bn2b3[1:2, :H2]
    b3 = bn2b3[2:3, :]

    # ---- fc1 (bias dropped: cancelled by BN) + bn1 + relu --------------------
    h = jnp.dot(x_ref[...].astype(jnp.bfloat16), w1_ref[...],
                preferred_element_type=jnp.float32)
    mu = jnp.sum(h, axis=0, keepdims=True) * inv_b
    d = h - mu
    var = jnp.sum(d * d, axis=0, keepdims=True) * inv_b
    scale = g1 * jax.lax.rsqrt(var + BN_EPS)
    h = jnp.maximum(d * scale + beta1, 0.0)

    # ---- fc2 (bias dropped) + bn2 + relu ------------------------------------
    h = jnp.dot(h.astype(jnp.bfloat16), w2_ref[...],
                preferred_element_type=jnp.float32)
    mu = jnp.sum(h, axis=0, keepdims=True) * inv_b
    d = h - mu
    var = jnp.sum(d * d, axis=0, keepdims=True) * inv_b
    scale = g2 * jax.lax.rsqrt(var + BN_EPS)
    h = jnp.maximum(d * scale + beta2, 0.0)

    # ---- fc3 (logits, lane-padded class dim) ---------------------------------
    o_ref[...] = (jnp.dot(h.astype(jnp.bfloat16), w3_ref[...],
                          preferred_element_type=jnp.float32)
                  + b3).astype(o_ref.dtype)


@functools.partial(jax.jit, static_argnums=(2,))
def improved_nn_forward(x, params, num_classes):
    """Single fused dispatch: pallas_call + padded-logit slice, all under jit."""
    b, in_size = x.shape
    h1 = params["w1"].shape[1]
    h2 = params["w2"].shape[1]
    c_pad = params["w3"].shape[1]

    args = (x, params["w1"], params["bn1"], params["w2"],
            params["bn2b3"], params["w3"])

    flops = 2 * b * (in_size * h1 + h1 * h2 + h2 * c_pad)
    bytes_accessed = sum(int(a.size) * a.dtype.itemsize for a in args) + b * c_pad * 4

    vmem_spec = pl.BlockSpec(memory_space=pltpu.MemorySpace.VMEM)
    out_padded = pl.pallas_call(
        improved_nn_kernel,
        out_shape=jax.ShapeDtypeStruct((b, c_pad), jnp.float32),
        in_specs=[vmem_spec] * len(args),
        out_specs=vmem_spec,
        cost_estimate=pl.CostEstimate(flops=flops,
                                      transcendentals=h1 + h2,
                                      bytes_accessed=bytes_accessed),
    )(*args)
    return out_padded[:, :num_classes]


def init_params(key, input_size, num_classes):
    """Init mirroring nn.Linear (U(-1/sqrt(fan_in), +1/sqrt(fan_in))) and
    nn.BatchNorm1d (weight=1, bias=0). Weights stored [in, out] in bf16.
    fc1/fc2 biases omitted (exact no-ops before BN). fc3 weight/bias are
    lane-padded from num_classes to a multiple of 128 with zeros. Small f32
    affine params are packed to cut input-DMA count."""
    def linear(k, fan_in, fan_out):
        kw, kb = jax.random.split(k)
        bound = 1.0 / float(fan_in) ** 0.5
        w = jax.random.uniform(kw, (fan_in, fan_out), jnp.float32, -bound, bound)
        bias = jax.random.uniform(kb, (fan_out,), jnp.float32, -bound, bound)
        return w, bias

    k1, k2, k3 = jax.random.split(key, 3)
    w1, _ = linear(k1, input_size, H1)      # fc1 bias dropped (cancelled by BN)
    w2, _ = linear(k2, H1, H2)              # fc2 bias dropped (cancelled by BN)
    w3, b3 = linear(k3, H2, num_classes)

    c_pad = ((num_classes + LANE - 1) // LANE) * LANE
    w3p = jnp.zeros((H2, c_pad), jnp.float32).at[:, :num_classes].set(w3)

    # Packed small f32 params (fewer DMA descriptors for a latency-bound call).
    bn1 = jnp.stack([jnp.ones((H1,), jnp.float32),
                     jnp.zeros((H1,), jnp.float32)], axis=0)        # [gamma1; beta1]
    bn2b3 = jnp.zeros((3, c_pad), jnp.float32)
    bn2b3 = bn2b3.at[0, :H2].set(1.0)                               # gamma2
    # row 1 stays zero -> beta2
    bn2b3 = bn2b3.at[2, :num_classes].set(b3)                       # fc3 bias (pad=0)

    return {
        "w1": w1.astype(jnp.bfloat16),
        "bn1": bn1,
        "w2": w2.astype(jnp.bfloat16),
        "bn2b3": bn2b3,
        "w3": w3p.astype(jnp.bfloat16),
    }


if __name__ == "__main__":
    INPUT_SIZE = 32
    NUM_CLASSES = 10
    BATCH = 8

    key = jax.random.PRNGKey(0)
    kx, kp = jax.random.split(key)
    x = jax.random.normal(kx, (BATCH, INPUT_SIZE), dtype=jnp.float32)
    params = init_params(kp, INPUT_SIZE, NUM_CLASSES)

    out = improved_nn_forward(x, params, NUM_CLASSES)
    out = jax.block_until_ready(out)
    assert out.shape == (BATCH, NUM_CLASSES)
    assert bool(jnp.all(jnp.isfinite(out)))
    print("KERNEL_OK")
</pallas_src>

<mosaic_0001>
module attributes {stable_mosaic.version = 11 : i64} {
  func.func @improved_nn_kernel(%arg0: memref<8x32xf32, #tpu.memory_space<vmem>>, %arg1: memref<32x256xbf16, #tpu.memory_space<vmem>>, %arg2: memref<2x256xf32, #tpu.memory_space<vmem>>, %arg3: memref<256x128xbf16, #tpu.memory_space<vmem>>, %arg4: memref<3x128xf32, #tpu.memory_space<vmem>>, %arg5: memref<128x128xbf16, #tpu.memory_space<vmem>>, %arg6: memref<8x128xf32, #tpu.memory_space<vmem>>) attributes {dimension_semantics = [], scalar_prefetch = 0 : i64, scratch_operands = 0 : i64, tpu.core_type = #tpu.core_type<tc>} {
    %c0 = arith.constant 0 : index
    %c0_0 = arith.constant 0 : index
    %0 = vector.load %arg2[%c0, %c0_0] : memref<2x256xf32, #tpu.memory_space<vmem>>, vector<2x256xf32>
    %c0_1 = arith.constant 0 : index
    %c0_2 = arith.constant 0 : index
    %1 = vector.load %arg4[%c0_1, %c0_2] : memref<3x128xf32, #tpu.memory_space<vmem>>, vector<3x128xf32>
    %2 = vector.extract_strided_slice %0 {offsets = [0, 0], sizes = [1, 256], strides = [1, 1]} : vector<2x256xf32> to vector<1x256xf32>
    %3 = vector.extract_strided_slice %0 {offsets = [1, 0], sizes = [1, 256], strides = [1, 1]} : vector<2x256xf32> to vector<1x256xf32>
    %4 = vector.extract_strided_slice %1 {offsets = [0, 0], sizes = [1, 128], strides = [1, 1]} : vector<3x128xf32> to vector<1x128xf32>
    %5 = vector.extract_strided_slice %1 {offsets = [1, 0], sizes = [1, 128], strides = [1, 1]} : vector<3x128xf32> to vector<1x128xf32>
    %6 = vector.extract_strided_slice %1 {offsets = [2, 0], sizes = [1, 128], strides = [1, 1]} : vector<3x128xf32> to vector<1x128xf32>
    %c0_3 = arith.constant 0 : index
    %c0_4 = arith.constant 0 : index
    %7 = vector.load %arg0[%c0_3, %c0_4] : memref<8x32xf32, #tpu.memory_space<vmem>>, vector<8x32xf32>
    %8 = arith.truncf %7 : vector<8x32xf32> to vector<8x32xbf16>
    %c0_5 = arith.constant 0 : index
    %c0_6 = arith.constant 0 : index
    %9 = vector.load %arg1[%c0_5, %c0_6] : memref<32x256xbf16, #tpu.memory_space<vmem>>, vector<32x256xbf16>
    %cst = arith.constant dense<0.000000e+00> : vector<8x256xf32>
    %10 = tpu.matmul %8, %9, %cst {dimension_numbers = #tpu.dot_dimension_numbers<[1], [0], [0], [1], [0, 0, 1, 1], [], []>} : vector<8x32xbf16>, vector<32x256xbf16>, vector<8x256xf32> -> vector<8x256xf32>
    %cst_7 = arith.constant dense<0.000000e+00> : vector<256xf32>
    %11 = vector.multi_reduction <add>, %10, %cst_7 [0] : vector<8x256xf32> to vector<256xf32>
    %12 = vector.shape_cast %11 : vector<256xf32> to vector<1x256xf32>
    %cst_8 = arith.constant 1.250000e-01 : f32
    %13 = vector.broadcast %cst_8 : f32 to vector<1x256xf32>
    %14 = arith.mulf %12, %13 : vector<1x256xf32>
    %15 = vector.broadcast %14 : vector<1x256xf32> to vector<8x256xf32>
    %16 = arith.subf %10, %15 : vector<8x256xf32>
    %17 = arith.mulf %16, %16 : vector<8x256xf32>
    %cst_9 = arith.constant dense<0.000000e+00> : vector<256xf32>
    %18 = vector.multi_reduction <add>, %17, %cst_9 [0] : vector<8x256xf32> to vector<256xf32>
    %19 = vector.shape_cast %18 : vector<256xf32> to vector<1x256xf32>
    %cst_10 = arith.constant 1.250000e-01 : f32
    %20 = vector.broadcast %cst_10 : f32 to vector<1x256xf32>
    %21 = arith.mulf %19, %20 : vector<1x256xf32>
    %cst_11 = arith.constant 9.99999974E-6 : f32
    %22 = vector.broadcast %cst_11 : f32 to vector<1x256xf32>
    %23 = arith.addf %21, %22 : vector<1x256xf32>
    %24 = math.rsqrt %23 : vector<1x256xf32>
    %25 = arith.mulf %2, %24 : vector<1x256xf32>
    %26 = vector.broadcast %25 : vector<1x256xf32> to vector<8x256xf32>
    %27 = arith.mulf %16, %26 : vector<8x256xf32>
    %28 = vector.broadcast %3 : vector<1x256xf32> to vector<8x256xf32>
    %29 = arith.addf %27, %28 : vector<8x256xf32>
    %cst_12 = arith.constant 0.000000e+00 : f32
    %30 = vector.broadcast %cst_12 : f32 to vector<8x256xf32>
    %31 = arith.maximumf %29, %30 : vector<8x256xf32>
    %32 = arith.truncf %31 : vector<8x256xf32> to vector<8x256xbf16>
    %c0_13 = arith.constant 0 : index
    %c0_14 = arith.constant 0 : index
    %33 = vector.load %arg3[%c0_13, %c0_14] : memref<256x128xbf16, #tpu.memory_space<vmem>>, vector<256x128xbf16>
    %cst_15 = arith.constant dense<0.000000e+00> : vector<8x128xf32>
    %34 = tpu.matmul %32, %33, %cst_15 {dimension_numbers = #tpu.dot_dimension_numbers<[1], [0], [0], [1], [0, 0, 1, 1], [], []>} : vector<8x256xbf16>, vector<256x128xbf16>, vector<8x128xf32> -> vector<8x128xf32>
    %cst_16 = arith.constant dense<0.000000e+00> : vector<128xf32>
    %35 = vector.multi_reduction <add>, %34, %cst_16 [0] : vector<8x128xf32> to vector<128xf32>
    %36 = vector.shape_cast %35 : vector<128xf32> to vector<1x128xf32>
    %cst_17 = arith.constant 1.250000e-01 : f32
    %37 = vector.broadcast %cst_17 : f32 to vector<1x128xf32>
    %38 = arith.mulf %36, %37 : vector<1x128xf32>
    %39 = vector.broadcast %38 : vector<1x128xf32> to vector<8x128xf32>
    %40 = arith.subf %34, %39 : vector<8x128xf32>
    %41 = arith.mulf %40, %40 : vector<8x128xf32>
    %cst_18 = arith.constant dense<0.000000e+00> : vector<128xf32>
    %42 = vector.multi_reduction <add>, %41, %cst_18 [0] : vector<8x128xf32> to vector<128xf32>
    %43 = vector.shape_cast %42 : vector<128xf32> to vector<1x128xf32>
    %cst_19 = arith.constant 1.250000e-01 : f32
    %44 = vector.broadcast %cst_19 : f32 to vector<1x128xf32>
    %45 = arith.mulf %43, %44 : vector<1x128xf32>
    %cst_20 = arith.constant 9.99999974E-6 : f32
    %46 = vector.broadcast %cst_20 : f32 to vector<1x128xf32>
    %47 = arith.addf %45, %46 : vector<1x128xf32>
    %48 = math.rsqrt %47 : vector<1x128xf32>
    %49 = arith.mulf %4, %48 : vector<1x128xf32>
    %50 = vector.broadcast %49 : vector<1x128xf32> to vector<8x128xf32>
    %51 = arith.mulf %40, %50 : vector<8x128xf32>
    %52 = vector.broadcast %5 : vector<1x128xf32> to vector<8x128xf32>
    %53 = arith.addf %51, %52 : vector<8x128xf32>
    %cst_21 = arith.constant 0.000000e+00 : f32
    %54 = vector.broadcast %cst_21 : f32 to vector<8x128xf32>
    %55 = arith.maximumf %53, %54 : vector<8x128xf32>
    %56 = arith.truncf %55 : vector<8x128xf32> to vector<8x128xbf16>
    %c0_22 = arith.constant 0 : index
    %c0_23 = arith.constant 0 : index
    %57 = vector.load %arg5[%c0_22, %c0_23] : memref<128x128xbf16, #tpu.memory_space<vmem>>, vector<128x128xbf16>
    %cst_24 = arith.constant dense<0.000000e+00> : vector<8x128xf32>
    %58 = tpu.matmul %56, %57, %cst_24 {dimension_numbers = #tpu.dot_dimension_numbers<[1], [0], [0], [1], [0, 0, 1, 1], [], []>} : vector<8x128xbf16>, vector<128x128xbf16>, vector<8x128xf32> -> vector<8x128xf32>
    %59 = vector.broadcast %6 : vector<1x128xf32> to vector<8x128xf32>
    %60 = arith.addf %58, %59 : vector<8x128xf32>
    %c0_25 = arith.constant 0 : index
    %c0_26 = arith.constant 0 : index
    %61 = vector.load %arg6[%c0_25, %c0_26] : memref<8x128xf32, #tpu.memory_space<vmem>>, vector<8x128xf32>
    tpu.vector_store %arg6[%c0_25, %c0_26], %60 {strides = array<i32>} : memref<8x128xf32, #tpu.memory_space<vmem>>, vector<8x128xf32>,
    return
  }
}

</mosaic_0001>

<llo_original>
// kernel: improved_nn_forward.1
$region0: #{improved_nn_forward.1}
  #allocation0 [shape = 'u32[]', space=smem, size = 0x4, offset = 0x4, fixed_abs, tag = 'smem constant byte address 0x4 - core index']
  #allocation1 [shape = 'u32[144,128]{1,0:T(1,128)}', space=vmem, size = 0x12000, scoped, tag = 'internal scratch']
  %s0 = inlined_call_operand.hbm [shape: f32[8,32], index: 0, kind: input, shape index: {}]
  %s1 = inlined_call_operand.hbm [shape: bf16[32,256], index: 1, kind: input, shape index: {}]
  %s2 = inlined_call_operand.hbm [shape: f32[2,256], index: 2, kind: input, shape index: {}]
  %s3 = inlined_call_operand.hbm [shape: bf16[256,128], index: 3, kind: input, shape index: {}]
  %s4 = inlined_call_operand.hbm [shape: f32[3,128], index: 4, kind: input, shape index: {}]
  %s5 = inlined_call_operand.hbm [shape: bf16[128,128], index: 5, kind: input, shape index: {}]
  %s6 = inlined_call_operand.hbm [shape: f32[8,128], index: 6, kind: output, shape index: {}]
  %s7 = sld [smem:[#allocation0]]
  $region58: #{improved_nn_forward.1} parent=0
    _
  %s9 = ssub.s32 1, %s7
  %s10 = scalar_select 0, %s9, %s7
  $region1: #{improved_nn_forward.1} parent=0
    #allocation2 [shape = 'u8[4096]{0}', space=vmem, size = 0x1000, scoped, tag = 'input window, operand 0, single buffered']
    #allocation3 [shape = 's32[1]{0}', space=sflag, size = 0x4, scoped, tag = 'scoped memory for improved_nn_forward.1']
    #allocation4 [shape = 's32[1]{0}', space=sflag, size = 0x4, scoped, tag = 'scoped memory for improved_nn_forward.1']
    #allocation5 [shape = 'u8[16384]{0}', space=vmem, size = 0x4000, scoped, tag = 'input window, operand 1, single buffered']
    #allocation6 [shape = 's32[1]{0}', space=sflag, size = 0x4, scoped, tag = 'scoped memory for improved_nn_forward.1']
    #allocation7 [shape = 'u8[2048]{0}', space=vmem, size = 0x800, scoped, tag = 'input window, operand 2, single buffered']
    #allocation8 [shape = 'u8[65536]{0}', space=vmem, size = 0x10000, scoped, tag = 'input window, operand 3, single buffered']
    #allocation9 [shape = 's32[1]{0}', space=sflag, size = 0x4, scoped, tag = 'scoped memory for improved_nn_forward.1']
    #allocation10 [shape = 'u8[2048]{0}', space=vmem, size = 0x800, scoped, tag = 'input window, operand 4, single buffered']
    #allocation11 [shape = 'u8[32768]{0}', space=vmem, size = 0x8000, scoped, tag = 'input window, operand 5, single buffered']
    #allocation12 [shape = 's32[1]{0}', space=sflag, size = 0x4, scoped, tag = 'scoped memory for improved_nn_forward.1']
    #allocation13 [shape = 'u8[4096]{0}', space=vmem, size = 0x1000, scoped, tag = 'output window, operand 0, single buffered']
    %11 = vsyncpa [#allocation3], 0
    %12 = vsyncpa [#allocation6], 0
    %13 = vsyncpa [#allocation9], 0
    %14 = vsyncpa [#allocation12], 0
    %15 = vsyncpa [#allocation4], 0
    // Predicated region
    $region2: #{improved_nn_forward.1} parent=1 // pred_check
      _
    $region3: #{improved_nn_forward.1} parent=1 // pred_check_branch
      %17 = sbr.rel (0) target = $region5
    $region4: #{improved_nn_forward.1} parent=1 // pred_region
      %s19 = ssub.s32 128, 128
      %20 = vsyncadd [#allocation3], %s19
      %s22 = sshll.u32 [#allocation2], 4
      %s23 = int_to_ptr.vmem [resolvable:$true] %s22
      %25 = dma.hbm_to_vmem [thread:$0]  %s0, 128, %s23, [#allocation3]
    $region5: #{improved_nn_forward.1} parent=1 // pred_fallthru
      _
    // Predicated region
    $region6: #{improved_nn_forward.1} parent=1 // pred_check
      _
    $region7: #{improved_nn_forward.1} parent=1 // pred_check_branch
      %27 = sbr.rel (0) target = $region9
    $region8: #{improved_nn_forward.1} parent=1 // pred_region
      %s29 = ssub.s32 512, 512
      %30 = vsyncadd [#allocation6], %s29
      %s31 = sshll.u32 [#allocation5], 4
      %s32 = int_to_ptr.vmem [resolvable:$true] %s31
      %37 = dma.hbm_to_vmem [thread:$0]  %s1, 512, %s32, [#allocation6], 128, 128, 8
    $region9: #{improved_nn_forward.1} parent=1 // pred_fallthru
      _
    // Predicated region
    $region10: #{improved_nn_forward.1} parent=1 // pred_check
      _
    $region11: #{improved_nn_forward.1} parent=1 // pred_check_branch
      %39 = sbr.rel (0) target = $region13
    $region12: #{improved_nn_forward.1} parent=1 // pred_region
      %s41 = ssub.s32 64, 64
      %42 = vsyncadd [#allocation6], %s41
      %s44 = sshll.u32 [#allocation7], 4
      %s45 = int_to_ptr.vmem [resolvable:$true] %s44
      %47 = dma.hbm_to_vmem [thread:$0]  %s2, 64, %s45, [#allocation6]
    $region13: #{improved_nn_forward.1} parent=1 // pred_fallthru
      _
    // Predicated region
    $region14: #{improved_nn_forward.1} parent=1 // pred_check
      _
    $region15: #{improved_nn_forward.1} parent=1 // pred_check_branch
      %49 = sbr.rel (0) target = $region17
    $region16: #{improved_nn_forward.1} parent=1 // pred_region
      %s51 = ssub.s32 2048, 2048
      %52 = vsyncadd [#allocation9], %s51
      %s53 = sshll.u32 [#allocation8], 4
      %s54 = int_to_ptr.vmem [resolvable:$true] %s53
      %59 = dma.hbm_to_vmem [thread:$0]  %s3, 2048, %s54, [#allocation9], 64, 64, 4
    $region17: #{improved_nn_forward.1} parent=1 // pred_fallthru
      _
    // Predicated region
    $region18: #{improved_nn_forward.1} parent=1 // pred_check
      _
    $region19: #{improved_nn_forward.1} parent=1 // pred_check_branch
      %61 = sbr.rel (0) target = $region21
    $region20: #{improved_nn_forward.1} parent=1 // pred_region
      %s63 = ssub.s32 64, 64
      %64 = vsyncadd [#allocation9], %s63
      %s66 = sshll.u32 [#allocation10], 4
      %s67 = int_to_ptr.vmem [resolvable:$true] %s66
      %69 = dma.hbm_to_vmem [thread:$0]  %s4, 64, %s67, [#allocation9]
    $region21: #{improved_nn_forward.1} parent=1 // pred_fallthru
      _
    // Predicated region
    $region22: #{improved_nn_forward.1} parent=1 // pred_check
      _
    $region23: #{improved_nn_forward.1} parent=1 // pred_check_branch
      %71 = sbr.rel (0) target = $region25
    $region24: #{improved_nn_forward.1} parent=1 // pred_region
      %s73 = ssub.s32 1024, 1024
      %74 = vsyncadd [#allocation12], %s73
      %s75 = sshll.u32 [#allocation11], 4
      %s76 = int_to_ptr.vmem [resolvable:$true] %s75
      %81 = dma.hbm_to_vmem [thread:$0]  %s5, 1024, %s76, [#allocation12], 64, 64, 4
    $region25: #{improved_nn_forward.1} parent=1 // pred_fallthru
      _
    // Predicated region
    $region26: #{improved_nn_forward.1} parent=1 // pred_check
      _
    $region27: #{improved_nn_forward.1} parent=1 // pred_check_branch
      %83 = sbr.rel (0) target = $region29
    $region28: #{improved_nn_forward.1} parent=1 // pred_region
      %84 = dma.done [#allocation3], 128
    $region29: #{improved_nn_forward.1} parent=1 // pred_fallthru
      _
    // Predicated region
    $region30: #{improved_nn_forward.1} parent=1 // pred_check
      _
    $region31: #{improved_nn_forward.1} parent=1 // pred_check_branch
      %86 = sbr.rel (0) target = $region33
    $region32: #{improved_nn_forward.1} parent=1 // pred_region
      %87 = dma.done [#allocation6], 512
    $region33: #{improved_nn_forward.1} parent=1 // pred_fallthru
      _
    // Predicated region
    $region34: #{improved_nn_forward.1} parent=1 // pred_check
      _
    $region35: #{improved_nn_forward.1} parent=1 // pred_check_branch
      %89 = sbr.rel (0) target = $region37
    $region36: #{improved_nn_forward.1} parent=1 // pred_region
      %90 = dma.done [#allocation6], 64
    $region37: #{improved_nn_forward.1} parent=1 // pred_fallthru
      _
    // Predicated region
    $region38: #{improved_nn_forward.1} parent=1 // pred_check
      _
    $region39: #{improved_nn_forward.1} parent=1 // pred_check_branch
      %92 = sbr.rel (0) target = $region41
    $region40: #{improved_nn_forward.1} parent=1 // pred_region
      %93 = dma.done [#allocation9], 2048
    $region41: #{improved_nn_forward.1} parent=1 // pred_fallthru
      _
    // Predicated region
    $region42: #{improved_nn_forward.1} parent=1 // pred_check
      _
    $region43: #{improved_nn_forward.1} parent=1 // pred_check_branch
      %95 = sbr.rel (0) target = $region45
    $region44: #{improved_nn_forward.1} parent=1 // pred_region
      %96 = dma.done [#allocation9], 64
    $region45: #{improved_nn_forward.1} parent=1 // pred_fallthru
      _
    // Predicated region
    $region46: #{improved_nn_forward.1} parent=1 // pred_check
      _
    $region47: #{improved_nn_forward.1} parent=1 // pred_check_branch
      %98 = sbr.rel (0) target = $region49
    $region48: #{improved_nn_forward.1} parent=1 // pred_region
      %99 = dma.done [#allocation12], 1024
    $region49: #{improved_nn_forward.1} parent=1 // pred_fallthru
      _
    %v101 = vld [vmem:[#allocation7] sm:$0xf]
    %v102 = vld [vmem:[#allocation10] sm:$0x7]
    %v103 = vld [vmem:[#allocation2] sm:$0xff]
    %v104 = vpack.c.bf16 %v103, %v103
    %v105 = vld [vmem:[#allocation5] sm:$0xff]
    %v106 = vld [vmem:[#allocation5 + $0x8] sm:$0xff]
    %v107 = vld [vmem:[#allocation5 + $0x10] sm:$0xff]
    %v108 = vld [vmem:[#allocation5 + $0x18] sm:$0xff]
    %v113 = vunpack.c.l.b16 %v105
    %v114 = vunpack.c.h.b16 %v105
    %v115 = vunpack.c.l.b16 %v106
    %v116 = vunpack.c.h.b16 %v106
    %v117 = vunpack.c.l.b16 %v107
    %v118 = vunpack.c.h.b16 %v107
    %v119 = vunpack.c.l.b16 %v108
    %v120 = vunpack.c.h.b16 %v108
    %v121 = vpack.c.b16 %v115, %v113
    %v122 = vpack.c.b16 %v116, %v114
    %v123 = vpack.c.b16 %v119, %v117
    %v124 = vpack.c.b16 %v120, %v118
    %vm129 = vcmask 261120
    %v131 = vsel %vm129, %v104, 0
    %133 = vmatprep.subr.bf16.mxu0 0
    %134 = vmatpush1.bf16.msra.mxu0 0
    %135 = vmatprep.subr.bf16.mxu0 0
    %136 = vmatpush1.bf16.msra.mxu0 0
    %137 = vmatprep.subr.bf16.mxu0 0
    %138 = vmatpush1.bf16.msra.mxu0 0
    %139 = vmatprep.subr.bf16.mxu0 0
    %140 = vmatpush1.bf16.msra.mxu0 0
    %141 = vmatprep.subr.bf16.mxu0 0
    %142 = vmatpush1.bf16.msra.mxu0 0
    %143 = vmatprep.subr.bf16.mxu0 0
    %144 = vmatpush1.bf16.msra.mxu0 0
    %145 = vmatprep.subr.bf16.mxu0 %v124
    %146 = vmatpush1.bf16.msra.mxu0 %v123
    %147 = vmatprep.subr.bf16.mxu0 %v122
    %148 = vmatpush1.bf16.msra.mxu0 %v121
    %149 = vmatprep.subr.bf16.mxu0 0
    %150 = vmatpush2.bf16.msra.mxu0 0
    %151 = vmatprep.subr.bf16.mxu0 0
    %152 = vmatpush2.bf16.msra.mxu0 0
    %153 = vmatprep.subr.bf16.mxu0 0
    %154 = vmatpush2.bf16.msra.mxu0 0
    %155 = vmatprep.subr.bf16.mxu0 0
    %156 = vmatpush2.bf16.msra.mxu0 0
    %157 = vmatprep.subr.bf16.mxu0 0
    %158 = vmatpush2.bf16.msra.mxu0 0
    %159 = vmatprep.subr.bf16.mxu0 0
    %160 = vmatpush2.bf16.msra.mxu0 0
    %161 = vmatprep.subr.bf16.mxu0 0
    %162 = vmatpush2.bf16.msra.mxu0 0
    %163 = vmatprep.subr.bf16.mxu0 0
    %164 = vmatpush2.bf16.msra.mxu0 0
    %165 = vmatprep.mubr.bf16.mxu0 0
    %166 = vmatmul.mubr.bf16.gmra.mxu0 %v131
    %v167 = vpop.f32.mrf.mxu0
    %v168 = vadd.f32 0.0, %v167
    %v169 = vpop.f32.mrf.mxu0
    %v170 = vadd.f32 0.0, %v169
    %v171 = vpop.f32.mrf.mxu0
    %v172 = vpop.f32.mrf.mxu0
    %173 = vdwg.mxu0
    %v174 = vrot.slane %v168, 4
    %v175 = vadd.f32 %v168, %v174
    %v176 = vrot.slane %v175, 2
    %v177 = vadd.f32 %v175, %v176
    %v178 = vrot.slane %v177, 1
    %v179 = vadd.f32 %v177, %v178
    %v180 = vrot.slane %v170, 4
    %v181 = vadd.f32 %v170, %v180
    %v182 = vrot.slane %v181, 2
    %v183 = vadd.f32 %v181, %v182
    %v184 = vrot.slane %v183, 1
    %v185 = vadd.f32 %v183, %v184
    %v186 = vmul.f32 %v179, 0.125
    %v187 = vmul.f32 %v185, 0.125
    %v188 = vsub.f32 %v168, %v186
    %v189 = vsub.f32 %v170, %v187
    %v190 = vmul.f32 %v188, %v188
    %v191 = vmul.f32 %v189, %v189
    %v192 = vrot.slane %v190, 4
    %v193 = vadd.f32 %v190, %v192
    %v194 = vrot.slane %v193, 2
    %v195 = vadd.f32 %v193, %v194
    %v196 = vrot.slane %v195, 1
    %v197 = vadd.f32 %v195, %v196
    %v198 = vrot.slane %v191, 4
    %v199 = vadd.f32 %v191, %v198
    %v200 = vrot.slane %v199, 2
    %v201 = vadd.f32 %v199, %v200
    %v202 = vrot.slane %v201, 1
    %v203 = vadd.f32 %v201, %v202
    %v204 = vmul.f32 %v197, 0.125
    %v205 = vmul.f32 %v203, 0.125
    %v206 = vadd.f32 %v204, 1e-05
    %v207 = vadd.f32 %v205, 1e-05
    %v208 = vrsqrt.pop %v206
    %v209 = vrsqrt.pop %v207
    %v212 = vcombine.low %v208, %v209
    %v214 = vunpack.c.l.s4 1983009808
    %v215 = vunpack.c.0.s8 %v214
    %v216 = vlaneseq
    %v217 = vshrl.u32 %v216, 7
    %v218 = vsub.s32 %v215, %v217
    %v219 = vrot.slane %v212, %v218
    %v221 = vmul.f32 %v101, %v219
    %v223 = vlaneseq
    %v224 = vshrl.u32 %v223, 7
    %v225 = vsub.s32 0, %v224
    %v226 = vrot.slane %v221, %v225
    %v227 = vlaneseq
    %v228 = vshrl.u32 %v227, 7
    %v229 = vsub.s32 2, %v228
    %v230 = vrot.slane %v221, %v229
    %v233 = vlaneseq
    %v234 = vshrl.u32 %v233, 7
    %v235 = vsub.s32 0, %v234
    %v236 = vrot.slane %v226, %v235
    %v237 = vlaneseq
    %v238 = vshrl.u32 %v237, 7
    %v239 = vsub.s32 0, %v238
    %v240 = vrot.slane %v230, %v239
    %v241 = vmul.f32 %v188, %v236
    %v242 = vmul.f32 %v189, %v240
    %v244 = vlaneseq
    %v245 = vshrl.u32 %v244, 7
    %v246 = vsub.s32 1, %v245
    %v247 = vrot.slane %v101, %v246
    %v248 = vlaneseq
    %v249 = vshrl.u32 %v248, 7
    %v250 = vsub.s32 3, %v249
    %v251 = vrot.slane %v101, %v250
    %v254 = vlaneseq
    %v255 = vshrl.u32 %v254, 7
    %v256 = vsub.s32 1, %v255
    %v257 = vrot.slane %v247, %v256
    %v258 = vlaneseq
    %v259 = vshrl.u32 %v258, 7
    %v260 = vsub.s32 1, %v259
    %v261 = vrot.slane %v251, %v260
    %v262 = vadd.f32 %v241, %v257
    %v263 = vadd.f32 %v242, %v261
    %v264 = vmax.f32 %v262, 0.0
    %v265 = vmax.f32 %v263, 0.0
    %v266 = vpack.c.bf16 %v264, %v264
    %v267 = vpack.c.bf16 %v265, %v265
    %v268 = vld [vmem:[#allocation8] sm:$0xf]
    %v269 = vld [vmem:[#allocation8 + $0x4] sm:$0xf]
    %v270 = vld [vmem:[#allocation8 + $0x8] sm:$0xf]
    %v271 = vld [vmem:[#allocation8 + $0xc] sm:$0xf]
    %v272 = vld [vmem:[#allocation8 + $0x10] sm:$0xf]
    %v273 = vld [vmem:[#allocation8 + $0x14] sm:$0xf]
    %v274 = vld [vmem:[#allocation8 + $0x18] sm:$0xf]
    %v275 = vld [vmem:[#allocation8 + $0x1c] sm:$0xf]
    %v276 = vld [vmem:[#allocation8 + $0x20] sm:$0xf]
    %v277 = vld [vmem:[#allocation8 + $0x24] sm:$0xf]
    %v278 = vld [vmem:[#allocation8 + $0x28] sm:$0xf]
    %v279 = vld [vmem:[#allocation8 + $0x2c] sm:$0xf]
    %v280 = vld [vmem:[#allocation8 + $0x30] sm:$0xf]
    %v281 = vld [vmem:[#allocation8 + $0x34] sm:$0xf]
    %v282 = vld [vmem:[#allocation8 + $0x38] sm:$0xf]
    %v283 = vld [vmem:[#allocation8 + $0x3c] sm:$0xf]
    %v284 = vld [vmem:[#allocation8 + $0x40] sm:$0xf]
    %v285 = vld [vmem:[#allocation8 + $0x44] sm:$0xf]
    %v286 = vld [vmem:[#allocation8 + $0x48] sm:$0xf]
    %v287 = vld [vmem:[#allocation8 + $0x4c] sm:$0xf]
    %v288 = vld [vmem:[#allocation8 + $0x50] sm:$0xf]
    %v289 = vld [vmem:[#allocation8 + $0x54] sm:$0xf]
    %v290 = vld [vmem:[#allocation8 + $0x58] sm:$0xf]
    %v291 = vld [vmem:[#allocation8 + $0x5c] sm:$0xf]
    %v292 = vld [vmem:[#allocation8 + $0x60] sm:$0xf]
    %v293 = vld [vmem:[#allocation8 + $0x64] sm:$0xf]
    %v294 = vld [vmem:[#allocation8 + $0x68] sm:$0xf]
    %v295 = vld [vmem:[#allocation8 + $0x6c] sm:$0xf]
    %v296 = vld [vmem:[#allocation8 + $0x70] sm:$0xf]
    %v297 = vld [vmem:[#allocation8 + $0x74] sm:$0xf]
    %v298 = vld [vmem:[#allocation8 + $0x78] sm:$0xf]
    %v299 = vld [vmem:[#allocation8 + $0x7c] sm:$0xf]
    %v332 = vunpack.c.l.b16 %v268
    %v333 = vunpack.c.l.b16 %v269
    %v334 = vunpack.c.l.b16 %v270
    %v335 = vunpack.c.l.b16 %v271
    %v336 = vunpack.c.l.b16 %v272
    %v337 = vunpack.c.l.b16 %v273
    %v338 = vunpack.c.l.b16 %v274
    %v339 = vunpack.c.l.b16 %v275
    %v340 = vunpack.c.l.b16 %v276
    %v341 = vunpack.c.l.b16 %v277
    %v342 = vunpack.c.l.b16 %v278
    %v343 = vunpack.c.l.b16 %v279
    %v344 = vunpack.c.l.b16 %v280
    %v345 = vunpack.c.l.b16 %v281
    %v346 = vunpack.c.l.b16 %v282
    %v347 = vunpack.c.l.b16 %v283
    %v348 = vunpack.c.l.b16 %v284
    %v349 = vunpack.c.l.b16 %v285
    %v350 = vunpack.c.l.b16 %v286
    %v351 = vunpack.c.l.b16 %v287
    %v352 = vunpack.c.l.b16 %v288
    %v353 = vunpack.c.l.b16 %v289
    %v354 = vunpack.c.l.b16 %v290
    %v355 = vunpack.c.l.b16 %v291
    %v356 = vunpack.c.l.b16 %v292
    %v357 = vunpack.c.l.b16 %v293
    %v358 = vunpack.c.l.b16 %v294
    %v359 = vunpack.c.l.b16 %v295
    %v360 = vunpack.c.l.b16 %v296
    %v361 = vunpack.c.l.b16 %v297
    %v362 = vunpack.c.l.b16 %v298
    %v363 = vunpack.c.l.b16 %v299
    %v364 = vpack.c.b16 %v333, %v332
    %v365 = vpack.c.b16 %v335, %v334
    %v366 = vpack.c.b16 %v337, %v336
    %v367 = vpack.c.b16 %v339, %v338
    %v368 = vpack.c.b16 %v341, %v340
    %v369 = vpack.c.b16 %v343, %v342
    %v370 = vpack.c.b16 %v345, %v344
    %v371 = vpack.c.b16 %v347, %v346
    %v372 = vpack.c.b16 %v349, %v348
    %v373 = vpack.c.b16 %v351, %v350
    %v374 = vpack.c.b16 %v353, %v352
    %v375 = vpack.c.b16 %v355, %v354
    %v376 = vpack.c.b16 %v357, %v356
    %v377 = vpack.c.b16 %v359, %v358
    %v378 = vpack.c.b16 %v361, %v360
    %v379 = vpack.c.b16 %v363, %v362
    %396 = vmatprep.subr.bf16.mxu0 0
    %397 = vmatpush1.bf16.msra.mxu0 %v371
    %398 = vmatprep.subr.bf16.mxu0 0
    %399 = vmatpush1.bf16.msra.mxu0 %v370
    %400 = vmatprep.subr.bf16.mxu0 0
    %401 = vmatpush1.bf16.msra.mxu0 %v369
    %402 = vmatprep.subr.bf16.mxu0 0
    %403 = vmatpush1.bf16.msra.mxu0 %v368
    %404 = vmatprep.subr.bf16.mxu0 0
    %405 = vmatpush1.bf16.msra.mxu0 %v367
    %406 = vmatprep.subr.bf16.mxu0 0
    %407 = vmatpush1.bf16.msra.mxu0 %v366
    %408 = vmatprep.subr.bf16.mxu0 0
    %409 = vmatpush1.bf16.msra.mxu0 %v365
    %410 = vmatprep.subr.bf16.mxu0 0
    %411 = vmatpush1.bf16.msra.mxu0 %v364
    %412 = vmatprep.subr.bf16.mxu0 0
    %413 = vmatpush2.bf16.msra.mxu0 %v379
    %414 = vmatprep.subr.bf16.mxu0 0
    %415 = vmatpush2.bf16.msra.mxu0 %v378
    %416 = vmatprep.subr.bf16.mxu0 0
    %417 = vmatpush2.bf16.msra.mxu0 %v377
    %418 = vmatprep.subr.bf16.mxu0 0
    %419 = vmatpush2.bf16.msra.mxu0 %v376
    %420 = vmatprep.subr.bf16.mxu0 0
    %421 = vmatpush2.bf16.msra.mxu0 %v375
    %422 = vmatprep.subr.bf16.mxu0 0
    %423 = vmatpush2.bf16.msra.mxu0 %v374
    %424 = vmatprep.subr.bf16.mxu0 0
    %425 = vmatpush2.bf16.msra.mxu0 %v373
    %426 = vmatprep.subr.bf16.mxu0 0
    %427 = vmatpush2.bf16.msra.mxu0 %v372
    %428 = vmatprep.mubr.bf16.mxu0 %v267
    %429 = vmatmul.mubr.bf16.gmra.mxu0 %v266
    %v430 = vpop.f32.mrf.mxu0
    %v431 = vadd.f32 0.0, %v430
    %v432 = vpop.f32.mrf.mxu0
    %v433 = vpop.f32.mrf.mxu0
    %v434 = vpop.f32.mrf.mxu0
    %435 = vdwg.mxu0
    %v436 = vrot.slane %v431, 4
    %v437 = vadd.f32 %v431, %v436
    %v438 = vrot.slane %v437, 2
    %v439 = vadd.f32 %v437, %v438
    %v440 = vrot.slane %v439, 1
    %v441 = vadd.f32 %v439, %v440
    %v442 = vmul.f32 %v441, 0.125
    %v443 = vsub.f32 %v431, %v442
    %v444 = vmul.f32 %v443, %v443
    %v445 = vrot.slane %v444, 4
    %v446 = vadd.f32 %v444, %v445
    %v447 = vrot.slane %v446, 2
    %v448 = vadd.f32 %v446, %v447
    %v449 = vrot.slane %v448, 1
    %v450 = vadd.f32 %v448, %v449
    %v451 = vmul.f32 %v450, 0.125
    %v452 = vadd.f32 %v451, 1e-05
    %v453 = vrsqrt.pop %v452
    %v454 = vmul.f32 %v102, %v453
    %v455 = vlaneseq
    %v456 = vshrl.u32 %v455, 7
    %v457 = vsub.s32 0, %v456
    %v458 = vrot.slane %v454, %v457
    %v459 = vmul.f32 %v443, %v458
    %v460 = vlaneseq
    %v461 = vshrl.u32 %v460, 7
    %v462 = vsub.s32 1, %v461
    %v463 = vrot.slane %v102, %v462
    %v464 = vadd.f32 %v459, %v463
    %v465 = vmax.f32 %v464, 0.0
    %v466 = vpack.c.bf16 %v465, %v465
    %v467 = vld [vmem:[#allocation11] sm:$0xf]
    %v468 = vld [vmem:[#allocation11 + $0x4] sm:$0xf]
    %v469 = vld [vmem:[#allocation11 + $0x8] sm:$0xf]
    %v470 = vld [vmem:[#allocation11 + $0xc] sm:$0xf]
    %v471 = vld [vmem:[#allocation11 + $0x10] sm:$0xf]
    %v472 = vld [vmem:[#allocation11 + $0x14] sm:$0xf]
    %v473 = vld [vmem:[#allocation11 + $0x18] sm:$0xf]
    %v474 = vld [vmem:[#allocation11 + $0x1c] sm:$0xf]
    %v475 = vld [vmem:[#allocation11 + $0x20] sm:$0xf]
    %v476 = vld [vmem:[#allocation11 + $0x24] sm:$0xf]
    %v477 = vld [vmem:[#allocation11 + $0x28] sm:$0xf]
    %v478 = vld [vmem:[#allocation11 + $0x2c] sm:$0xf]
    %v479 = vld [vmem:[#allocation11 + $0x30] sm:$0xf]
    %v480 = vld [vmem:[#allocation11 + $0x34] sm:$0xf]
    %v481 = vld [vmem:[#allocation11 + $0x38] sm:$0xf]
    %v482 = vld [vmem:[#allocation11 + $0x3c] sm:$0xf]
    %v483 = vlaneseq
    %v484 = vshrl.u32 %v483, 7
    %v485 = vsub.s32 2, %v484
    %v486 = vrot.slane %v102, %v485
    %v503 = vunpack.c.l.b16 %v467
    %v504 = vunpack.c.l.b16 %v468
    %v505 = vunpack.c.l.b16 %v469
    %v506 = vunpack.c.l.b16 %v470
    %v507 = vunpack.c.l.b16 %v471
    %v508 = vunpack.c.l.b16 %v472
    %v509 = vunpack.c.l.b16 %v473
    %v510 = vunpack.c.l.b16 %v474
    %v511 = vunpack.c.l.b16 %v475
    %v512 = vunpack.c.l.b16 %v476
    %v513 = vunpack.c.l.b16 %v477
    %v514 = vunpack.c.l.b16 %v478
    %v515 = vunpack.c.l.b16 %v479
    %v516 = vunpack.c.l.b16 %v480
    %v517 = vunpack.c.l.b16 %v481
    %v518 = vunpack.c.l.b16 %v482
    %v519 = vpack.c.b16 %v504, %v503
    %v520 = vpack.c.b16 %v506, %v505
    %v521 = vpack.c.b16 %v508, %v507
    %v522 = vpack.c.b16 %v510, %v509
    %v523 = vpack.c.b16 %v512, %v511
    %v524 = vpack.c.b16 %v514, %v513
    %v525 = vpack.c.b16 %v516, %v515
    %v526 = vpack.c.b16 %v518, %v517
    %535 = vmatprep.subr.bf16.mxu0 0
    %536 = vmatpush1.bf16.msra.mxu0 %v526
    %537 = vmatprep.subr.bf16.mxu0 0
    %538 = vmatpush1.bf16.msra.mxu0 %v525
    %539 = vmatprep.subr.bf16.mxu0 0
    %540 = vmatpush1.bf16.msra.mxu0 %v524
    %541 = vmatprep.subr.bf16.mxu0 0
    %542 = vmatpush1.bf16.msra.mxu0 %v523
    %543 = vmatprep.subr.bf16.mxu0 0
    %544 = vmatpush1.bf16.msra.mxu0 %v522
    %545 = vmatprep.subr.bf16.mxu0 0
    %546 = vmatpush1.bf16.msra.mxu0 %v521
    %547 = vmatprep.subr.bf16.mxu0 0
    %548 = vmatpush1.bf16.msra.mxu0 %v520
    %549 = vmatprep.subr.bf16.mxu0 0
    %550 = vmatpush1.bf16.msra.mxu0 %v519
    %551 = vmatprep.subr.bf16.mxu0 0
    %552 = vmatpush2.bf16.msra.mxu0 0
    %553 = vmatprep.subr.bf16.mxu0 0
    %554 = vmatpush2.bf16.msra.mxu0 0
    %555 = vmatprep.subr.bf16.mxu0 0
    %556 = vmatpush2.bf16.msra.mxu0 0
    %557 = vmatprep.subr.bf16.mxu0 0
    %558 = vmatpush2.bf16.msra.mxu0 0
    %559 = vmatprep.subr.bf16.mxu0 0
    %560 = vmatpush2.bf16.msra.mxu0 0
    %561 = vmatprep.subr.bf16.mxu0 0
    %562 = vmatpush2.bf16.msra.mxu0 0
    %563 = vmatprep.subr.bf16.mxu0 0
    %564 = vmatpush2.bf16.msra.mxu0 0
    %565 = vmatprep.subr.bf16.mxu0 0
    %566 = vmatpush2.bf16.msra.mxu0 0
    %567 = vmatprep.mubr.bf16.mxu0 0
    %568 = vmatmul.mubr.bf16.gmra.mxu0 %v466
    %v569 = vpop.f32.mrf.mxu0
    %v570 = vadd.f32 %v486, %v569
    %v571 = vpop.f32.mrf.mxu0
    %v572 = vpop.f32.mrf.mxu0
    %v573 = vpop.f32.mrf.mxu0
    %574 = vdwg.mxu0
    %575 = vst [vmem:[#allocation13] sm:$0xff] %v570
    // Predicated region
    $region50: #{improved_nn_forward.1} parent=1 // pred_check
      _
    $region51: #{improved_nn_forward.1} parent=1 // pred_check_branch
      %577 = sbr.rel (0) target = $region53
    $region52: #{improved_nn_forward.1} parent=1 // pred_region
      %s579 = ssub.s32 128, 128
      %580 = vsyncadd [#allocation4], %s579
      %s582 = sshll.u32 [#allocation13], 4
      %s583 = int_to_ptr.vmem [resolvable:$true] %s582
      %585 = dma.vmem_to_hbm [thread:$0]  %s583, 128, %s6, [#allocation4]
    $region53: #{improved_nn_forward.1} parent=1 // pred_fallthru
      _
    // Predicated region
    $region54: #{improved_nn_forward.1} parent=1 // pred_check
      _
    $region55: #{improved_nn_forward.1} parent=1 // pred_check_branch
      %587 = sbr.rel (0) target = $region57
    $region56: #{improved_nn_forward.1} parent=1 // pred_region
      %588 = dma.done [#allocation4], 128
    $region57: #{improved_nn_forward.1} parent=1 // pred_fallthru
      _
    %589 = vsyncpa [#allocation3], 1
    %590 = vsyncpa [#allocation6], 1
    %591 = vsyncpa [#allocation9], 1
    %592 = vsyncpa [#allocation12], 1
    %593 = vsyncpa [#allocation4], 1

</llo_original>
